<compile_context>
chip_gen: v5e
topology: v5e:2x2
jax: 0.10.0
libtpu: 0.0.40
codegen_flags: <defaults>
</compile_context>

<pallas_src>
import jax
import jax.numpy as jnp
from jax.experimental import pallas as pl
from jax.experimental.pallas import tpu as pltpu


def _mask_kernel(mask_ref, mv_ref, x_ref, o_ref):
    # mask_ref: (1, FD) int32 ; mv_ref: (1, FD) ; x_ref / o_ref: (TB, FD)
    m = mask_ref[...] != 0
    o_ref[...] = jnp.where(m, mv_ref[...], x_ref[...])


def _mask_complement_kernel(mask_ref, mv_ref, x_ref, o1_ref, o2_ref):
    m = mask_ref[...] != 0
    mv = mv_ref[...]
    x = x_ref[...]
    o1_ref[...] = jnp.where(m, mv, x)
    o2_ref[...] = jnp.where(m, x, mv)


def _pick_batch_tile(batch, fd, itemsize, n_outputs,
                     vmem_budget_bytes=32 * 1024 * 1024):
    # Double-buffered x input + double-buffered output(s); mask / mask_vals
    # tiles are (1, FD) and negligible.
    bytes_per_row = 2 * (1 + n_outputs) * fd * itemsize
    tb = max(1, vmem_budget_bytes // bytes_per_row)
    if tb >= batch:
        return batch                       # full extent -> no sublane constraint
    pack = 32                              # sublane-packing safe for f32/bf16/i8
    tb = max(pack, (tb // pack) * pack)
    return min(tb, batch)


def feature_masker(x, mask_vals, p, key, *, return_complement=False,
                   batch_tile=None):
    """Pallas TPU implementation of FeatureMasker.forward.

    x:         (B, F, D) activations
    mask_vals: (1, F, D) values to substitute (zeros or learned)
    p:         masking probability
    key:       jax PRNG key used for the per-feature mask draw
    """
    B, F, D = x.shape
    FD = F * D

    # torch.rand([1, F, 1], device=x.device) < p   (same mask for all batch / D)
    u = jax.random.uniform(key, (1, F, 1))
    mask = u < p
    mask_fd = jnp.broadcast_to(mask, (1, F, D)).reshape(1, FD).astype(jnp.int32)
    mv_fd = jnp.reshape(mask_vals, (1, FD)).astype(x.dtype)
    x2d = x.reshape(B, FD)

    n_out = 2 if return_complement else 1
    tb = batch_tile if batch_tile is not None else _pick_batch_tile(
        B, FD, x.dtype.itemsize, n_out)
    grid = (pl.cdiv(B, tb),)

    in_specs = [
        pl.BlockSpec((1, FD), lambda i: (0, 0)),    # mask (broadcast over tiles)
        pl.BlockSpec((1, FD), lambda i: (0, 0)),    # mask_vals (broadcast)
        pl.BlockSpec((tb, FD), lambda i: (i, 0)),   # x tile
    ]

    compiler_params = pltpu.CompilerParams(
        dimension_semantics=("parallel",),
        vmem_limit_bytes=48 * 1024 * 1024,
    )

    if not return_complement:
        out = pl.pallas_call(
            _mask_kernel,
            out_shape=jax.ShapeDtypeStruct((B, FD), x.dtype),
            grid_spec=pl.GridSpec(
                grid=grid,
                in_specs=in_specs,
                out_specs=pl.BlockSpec((tb, FD), lambda i: (i, 0)),
            ),
            compiler_params=compiler_params,
        )(mask_fd, mv_fd, x2d)
        return out.reshape(B, F, D)
    else:
        o1, o2 = pl.pallas_call(
            _mask_complement_kernel,
            out_shape=(jax.ShapeDtypeStruct((B, FD), x.dtype),
                       jax.ShapeDtypeStruct((B, FD), x.dtype)),
            grid_spec=pl.GridSpec(
                grid=grid,
                in_specs=in_specs,
                out_specs=(pl.BlockSpec((tb, FD), lambda i: (i, 0)),
                           pl.BlockSpec((tb, FD), lambda i: (i, 0))),
            ),
            compiler_params=compiler_params,
        )(mask_fd, mv_fd, x2d)
        return o1.reshape(B, F, D), o2.reshape(B, F, D)


if __name__ == "__main__":
    # Small shapes implied by the module: (batch, n_features, input_size)
    batch, n_features, input_size = 2, 4, 32
    p = 0.5

    key = jax.random.PRNGKey(0)
    kx, kmv, kmask = jax.random.split(key, 3)

    x = jax.random.normal(kx, (batch, n_features, input_size), dtype=jnp.float32)

    # masking_strategy == "zero": zeros; == "learned": randn init.
    mask_vals_zero = jnp.zeros((1, n_features, input_size), dtype=jnp.float32)
    mask_vals_learned = jax.random.normal(
        kmv, (1, n_features, input_size), dtype=jnp.float32)

    # return_complement=False, masking_strategy="zero"
    y = feature_masker(x, mask_vals_zero, p, kmask, return_complement=False)
    jax.block_until_ready(y)

    # return_complement=True, masking_strategy="learned"
    y1, y2 = feature_masker(x, mask_vals_learned, p, kmask,
                            return_complement=True)
    jax.block_until_ready((y1, y2))

    # Pure-JAX reference mirroring the PyTorch forward with the same mask draw.
    u = jax.random.uniform(kmask, (1, n_features, 1))
    mask = jnp.broadcast_to(u < p, x.shape)
    ref = jnp.where(mask, mask_vals_zero, x)
    ref1 = jnp.where(mask, mask_vals_learned, x)
    ref2 = jnp.where(mask, x, mask_vals_learned)

    assert jnp.array_equal(y, ref), "mismatch (zero strategy)"
    assert jnp.array_equal(y1, ref1), "mismatch (learned strategy, x1)"
    assert jnp.array_equal(y2, ref2), "mismatch (learned strategy, x2 complement)"

    print("KERNEL_OK")
</pallas_src>

<mosaic_0001>
module attributes {stable_mosaic.version = 11 : i64} {
  func.func @_mask_kernel(%arg0: i32, %arg1: memref<1x128xi32, #tpu.memory_space<vmem>>, %arg2: memref<1x128xf32, #tpu.memory_space<vmem>>, %arg3: memref<2x128xf32, #tpu.memory_space<vmem>>, %arg4: memref<2x128xf32, #tpu.memory_space<vmem>>) attributes {dimension_semantics = [#tpu.dimension_semantics<parallel>], iteration_bounds = array<i64: 1>, scalar_prefetch = 0 : i64, scratch_operands = 0 : i64, tpu.core_type = #tpu.core_type<tc>, window_params = [{pipeline_mode = #tpu.pipeline_mode<synchronous>, transform_indices = @transform_0, window_bounds = array<i64: 1, 128>}, {pipeline_mode = #tpu.pipeline_mode<synchronous>, transform_indices = @transform_1, window_bounds = array<i64: 1, 128>}, {transform_indices = @transform_2, window_bounds = array<i64: 2, 128>}, {transform_indices = @transform_3, window_bounds = array<i64: 2, 128>}]} {
    %c0 = arith.constant 0 : index
    %c0_0 = arith.constant 0 : index
    %0 = vector.load %arg1[%c0, %c0_0] : memref<1x128xi32, #tpu.memory_space<vmem>>, vector<1x128xi32>
    %c0_i32 = arith.constant 0 : i32
    %1 = vector.broadcast %c0_i32 : i32 to vector<1x128xi32>
    %2 = arith.cmpi ne, %0, %1 : vector<1x128xi32>
    %c0_1 = arith.constant 0 : index
    %c0_2 = arith.constant 0 : index
    %3 = vector.load %arg2[%c0_1, %c0_2] : memref<1x128xf32, #tpu.memory_space<vmem>>, vector<1x128xf32>
    %c0_3 = arith.constant 0 : index
    %c0_4 = arith.constant 0 : index
    %4 = vector.load %arg3[%c0_3, %c0_4] : memref<2x128xf32, #tpu.memory_space<vmem>>, vector<2x128xf32>
    %5 = vector.shape_cast %2 : vector<1x128xi1> to vector<1x128xi1>
    %6 = vector.broadcast %5 : vector<1x128xi1> to vector<2x128xi1>
    %7 = vector.shape_cast %3 : vector<1x128xf32> to vector<1x128xf32>
    %8 = vector.broadcast %7 : vector<1x128xf32> to vector<2x128xf32>
    %9 = arith.select %6, %8, %4 : vector<2x128xi1>, vector<2x128xf32>
    %c0_5 = arith.constant 0 : index
    %c0_6 = arith.constant 0 : index
    %10 = vector.load %arg4[%c0_5, %c0_6] : memref<2x128xf32, #tpu.memory_space<vmem>>, vector<2x128xf32>
    tpu.vector_store %arg4[%c0_5, %c0_6], %9 {strides = array<i32>} : memref<2x128xf32, #tpu.memory_space<vmem>>, vector<2x128xf32>,
    return
  }
  func.func @transform_0(%arg0: i32) -> (i32, i32) {
    %c0_i32 = arith.constant 0 : i32
    %c0_i32_0 = arith.constant 0 : i32
    %c0_i32_1 = arith.constant 0 : i32
    return %c0_i32, %c0_i32_0 : i32, i32
  }
  func.func @transform_1(%arg0: i32) -> (i32, i32) {
    %c0_i32 = arith.constant 0 : i32
    %c0_i32_0 = arith.constant 0 : i32
    %c0_i32_1 = arith.constant 0 : i32
    return %c0_i32, %c0_i32_0 : i32, i32
  }
  func.func @transform_2(%arg0: i32) -> (i32, i32) {
    %c0_i32 = arith.constant 0 : i32
    %c0_i32_0 = arith.constant 0 : i32
    return %arg0, %c0_i32 : i32, i32
  }
  func.func @transform_3(%arg0: i32) -> (i32, i32) {
    %c0_i32 = arith.constant 0 : i32
    %c0_i32_0 = arith.constant 0 : i32
    return %arg0, %c0_i32 : i32, i32
  }
}

</mosaic_0001>

<llo_original>
// kernel: tpu_custom_call.1
$region0: #{tpu_custom_call.1}
  #allocation0 [shape = 'u32[]', space=smem, size = 0x4, offset = 0x4, fixed_abs, tag = 'smem constant byte address 0x4 - core index']
  #allocation1 [shape = 'u32[72,128]{1,0:T(1,128)}', space=vmem, size = 0x9000, scoped, tag = 'internal scratch']
  %s0 = inlined_call_operand.hbm [shape: s32[1,128], index: 0, kind: input, shape index: {}]
  %s1 = inlined_call_operand.hbm [shape: f32[1,128], index: 1, kind: input, shape index: {}]
  %s2 = inlined_call_operand.hbm [shape: f32[2,128], index: 2, kind: input, shape index: {}]
  %s3 = inlined_call_operand.hbm [shape: f32[2,128], index: 3, kind: output, shape index: {}]
  %s4 = sld [smem:[#allocation0]]
  $region34: #{tpu_custom_call.1} parent=0
    _
  %s6 = ssub.s32 1, %s4
  %s7 = scalar_select 0, %s6, %s4
  $region1: #{tpu_custom_call.1} parent=0
    #allocation2 [shape = 'u8[512]{0}', space=vmem, size = 0x400, scoped, tag = 'input window, operand 0, single buffered']
    #allocation3 [shape = 's32[1]{0}', space=sflag, size = 0x4, scoped, tag = 'scoped memory for tpu_custom_call.1']
    #allocation4 [shape = 's32[1]{0}', space=sflag, size = 0x4, scoped, tag = 'scoped memory for tpu_custom_call.1']
    #allocation5 [shape = 'u8[512]{0}', space=vmem, size = 0x400, scoped, tag = 'input window, operand 1, single buffered']
    #allocation6 [shape = 's32[1]{0}', space=sflag, size = 0x4, scoped, tag = 'scoped memory for tpu_custom_call.1']
    #allocation7 [shape = 'u8[1024]{0}', space=vmem, size = 0x400, scoped, tag = 'input window, operand 2, single buffered']
    #allocation8 [shape = 'u8[1024]{0}', space=vmem, size = 0x400, scoped, tag = 'output window, operand 0, single buffered']
    %8 = vsyncpa [#allocation3], 0
    %9 = vsyncpa [#allocation6], 0
    %10 = vsyncpa [#allocation4], 0
    // Predicated region
    $region2: #{tpu_custom_call.1} parent=1 // pred_check
      _
    $region3: #{tpu_custom_call.1} parent=1 // pred_check_branch
      %12 = sbr.rel (0) target = $region5
    $region4: #{tpu_custom_call.1} parent=1 // pred_region
      %14 = vsyncadd [#allocation3], 0
      %s16 = sshll.u32 %s0, 4
      %s17 = int_to_ptr.hbm [resolvable:$true] %s16
      %s18 = sshll.u32 [#allocation2], 4
      %s19 = int_to_ptr.vmem [resolvable:$true] %s18
      %21 = dma.hbm_to_vmem [thread:$0]  %s17, 16, %s19, [#allocation3]
    $region5: #{tpu_custom_call.1} parent=1 // pred_fallthru
      _
    // Predicated region
    $region6: #{tpu_custom_call.1} parent=1 // pred_check
      _
    $region7: #{tpu_custom_call.1} parent=1 // pred_check_branch
      %23 = sbr.rel (0) target = $region9
    $region8: #{tpu_custom_call.1} parent=1 // pred_region
      %25 = vsyncadd [#allocation6], 0
      %s27 = sshll.u32 %s1, 4
      %s28 = int_to_ptr.hbm [resolvable:$true] %s27
      %s29 = sshll.u32 [#allocation5], 4
      %s30 = int_to_ptr.vmem [resolvable:$true] %s29
      %32 = dma.hbm_to_vmem [thread:$0]  %s28, 16, %s30, [#allocation6]
    $region9: #{tpu_custom_call.1} parent=1 // pred_fallthru
      _
    // Predicated region
    $region10: #{tpu_custom_call.1} parent=1 // pred_check
      _
    $region11: #{tpu_custom_call.1} parent=1 // pred_check_branch
      %34 = sbr.rel (0) target = $region13
    $region12: #{tpu_custom_call.1} parent=1 // pred_region
      %36 = vsyncadd [#allocation6], 0
      %s38 = sshll.u32 %s2, 4
      %s39 = int_to_ptr.hbm [resolvable:$true] %s38
      %s40 = sshll.u32 [#allocation7], 4
      %s41 = int_to_ptr.vmem [resolvable:$true] %s40
      %43 = dma.hbm_to_vmem [thread:$0]  %s39, 32, %s41, [#allocation6]
    $region13: #{tpu_custom_call.1} parent=1 // pred_fallthru
      _
    // Predicated region
    $region14: #{tpu_custom_call.1} parent=1 // pred_check
      _
    $region15: #{tpu_custom_call.1} parent=1 // pred_check_branch
      %45 = sbr.rel (0) target = $region17
    $region16: #{tpu_custom_call.1} parent=1 // pred_region
      %47 = dma.done [#allocation3], 16
    $region17: #{tpu_custom_call.1} parent=1 // pred_fallthru
      _
    // Predicated region
    $region18: #{tpu_custom_call.1} parent=1 // pred_check
      _
    $region19: #{tpu_custom_call.1} parent=1 // pred_check_branch
      %49 = sbr.rel (0) target = $region21
    $region20: #{tpu_custom_call.1} parent=1 // pred_region
      %51 = dma.done [#allocation6], 16
    $region21: #{tpu_custom_call.1} parent=1 // pred_fallthru
      _
    // Predicated region
    $region22: #{tpu_custom_call.1} parent=1 // pred_check
      _
    $region23: #{tpu_custom_call.1} parent=1 // pred_check_branch
      %53 = sbr.rel (0) target = $region25
    $region24: #{tpu_custom_call.1} parent=1 // pred_region
      %55 = dma.done [#allocation6], 32
    $region25: #{tpu_custom_call.1} parent=1 // pred_fallthru
      _
    %v56 = vld [vmem:[#allocation2] sm:$0x1]
    %vm57 = vcmp.ne.s32.totalorder %v56, 0
    %v58 = vld [vmem:[#allocation5] sm:$0x1]
    %v59 = vld [vmem:[#allocation7] sm:$0x3]
    %v60 = vsel %vm57, 1, 0
    %v61 = vperm.slane %v60, 0
    %vm62 = vcmp.eq.s32.totalorder %v61, 1
    %v64 = vperm.slane %v58, 0
    %v66 = vsel %vm62, %v64, %v59
    %67 = vst [vmem:[#allocation8] sm:$0x3] %v66
    // Predicated region
    $region26: #{tpu_custom_call.1} parent=1 // pred_check
      _
    $region27: #{tpu_custom_call.1} parent=1 // pred_check_branch
      %69 = sbr.rel (0) target = $region29
    $region28: #{tpu_custom_call.1} parent=1 // pred_region
      %71 = vsyncadd [#allocation4], 0
      %s73 = sshll.u32 [#allocation8], 4
      %s74 = int_to_ptr.vmem [resolvable:$true] %s73
      %s75 = sshll.u32 %s3, 4
      %s76 = int_to_ptr.hbm [resolvable:$true] %s75
      %78 = dma.vmem_to_hbm [thread:$0]  %s74, 32, %s76, [#allocation4]
    $region29: #{tpu_custom_call.1} parent=1 // pred_fallthru
      _
    // Predicated region
    $region30: #{tpu_custom_call.1} parent=1 // pred_check
      _
    $region31: #{tpu_custom_call.1} parent=1 // pred_check_branch
      %80 = sbr.rel (0) target = $region33
    $region32: #{tpu_custom_call.1} parent=1 // pred_region
      %82 = dma.done [#allocation4], 32
    $region33: #{tpu_custom_call.1} parent=1 // pred_fallthru
      _
    %83 = vsyncpa [#allocation3], 1
    %84 = vsyncpa [#allocation6], 1
    %85 = vsyncpa [#allocation4], 1

</llo_original>
